<compile_context>
chip_gen: v7x
topology: tpu7x:2x2x1
jax: 0.10.0
libtpu: 0.0.40
codegen_flags: <defaults>
</compile_context>

<pallas_src>
import numpy as np
import jax
import jax.numpy as jnp
from jax.experimental import pallas as pl
from jax.experimental.pallas import tpu as pltpu


def get_quantized_range(bitwidth):
    quantized_max = (1 << (bitwidth - 1)) - 1
    quantized_min = -(1 << (bitwidth - 1))
    return quantized_min, quantized_max


def _round_up(x, m):
    return (x + m - 1) // m * m


def _pick_tile(padded_dim, candidates):
    for c in candidates:
        if padded_dim % c == 0:
            return c
    return padded_dim


def _use_int8_mxu():
    """v5e/v6e have a native int8 MXU path.  Everything else uses bf16 inputs with
    f32 per-step accumulation cast to int32 (exact for tk <= 512)."""
    try:
        kind = jax.devices()[0].device_kind.lower()
    except Exception:
        kind = ""
    return ("v5" in kind) or ("v6" in kind)


def _epilogue(acc_f32, bias, scale, output_zero_point, qmin, qmax, out_dtype):
    y = (acc_f32 + bias) * scale                 # bias add + per-channel requant
    y = y + jnp.float32(output_zero_point)
    y = jnp.round(y)
    y = jnp.clip(y, jnp.float32(qmin), jnp.float32(qmax))
    return y.astype(out_dtype)


def _make_multik_kernel(output_zero_point, qmin, qmax, int8_mxu):
    """K-reduction spans several grid steps: int32 VMEM accumulator + pl.when epilogue."""
    def kernel(x_ref, w_ref, bias_ref, scale_ref, out_ref, acc_ref):
        k = pl.program_id(3)

        @pl.when(k == 0)
        def _init():
            acc_ref[...] = jnp.zeros_like(acc_ref)

        if int8_mxu:
            acc_ref[...] += jnp.dot(x_ref[0], w_ref[0],
                                    preferred_element_type=jnp.int32)
        else:
            # bf16 x bf16 -> f32 is exact for int8 operands when tk <= 512; cast to
            # int32 per step so the full-K accumulation stays exact for any Kp.
            acc_ref[...] += jnp.dot(
                x_ref[0].astype(jnp.bfloat16), w_ref[0].astype(jnp.bfloat16),
                preferred_element_type=jnp.float32).astype(jnp.int32)

        @pl.when(k == pl.num_programs(3) - 1)
        def _finalize():
            out_ref[...] = _epilogue(acc_ref[...].astype(jnp.float32),
                                     bias_ref[0], scale_ref[0],
                                     output_zero_point, qmin, qmax, out_ref.dtype)

    return kernel


def _make_singlek_kernel(output_zero_point, qmin, qmax, int8_mxu):
    """Kp == tk fast path: no scratch accumulator, single dot + fused requant store."""
    def kernel(x_ref, w_ref, bias_ref, scale_ref, out_ref):
        if int8_mxu:
            acc = jnp.dot(x_ref[0], w_ref[0],
                          preferred_element_type=jnp.int32).astype(jnp.float32)
        else:
            acc = jnp.dot(x_ref[0].astype(jnp.bfloat16),
                          w_ref[0].astype(jnp.bfloat16),
                          preferred_element_type=jnp.float32)  # exact (Kp <= 512)
        out_ref[...] = _epilogue(acc, bias_ref[0], scale_ref[0],
                                 output_zero_point, qmin, qmax, out_ref.dtype)

    return kernel


def _im2col_nhwc(xp, KH, KW, sh, sw, dh, dw, OH, OW, G, Cin_g):
    """xp: [N, Hp, Wp, Cin] (already padded with the input zero point).
    Returns [G, M, K] with K ordered as (kh, kw, c_within_group)."""
    N = xp.shape[0]
    M = N * OH * OW
    K = KH * KW * Cin_g
    slices = []
    for kh in range(KH):
        for kw in range(KW):
            slices.append(xp[:, kh * dh: kh * dh + (OH - 1) * sh + 1: sh,
                             kw * dw: kw * dw + (OW - 1) * sw + 1: sw, :])
    patches = jnp.stack(slices, axis=3)               # [N, OH, OW, KH*KW, Cin]
    if G == 1:
        return patches.reshape(1, M, K)
    patches = patches.reshape(N, OH, OW, KH * KW, G, Cin_g)
    patches = jnp.transpose(patches, (4, 0, 1, 2, 3, 5))
    return patches.reshape(G, M, K)


def quantized_conv2d_pallas(x, w_all, bias_all, scale_all, *,
                            K, Kp, tk, OC, OC_g, OCgp, tn, KH, KW,
                            stride, padding, dilation, groups,
                            input_zero_point, output_zero_point, feature_bitwidth):
    assert len(padding) == 4
    assert x.dtype == jnp.int8 and w_all.dtype == jnp.int8
    N, Cin, H, W = x.shape
    sh, sw = stride
    dh, dw = dilation
    wl, wr, pt, pb = padding       # torch F.pad convention on last 2 dims: (Wl, Wr, Ht, Hb)
    G = groups
    Cin_g = Cin // G

    # NHWC once; spatial pad with the input zero point.
    x_nhwc = jnp.transpose(x, (0, 2, 3, 1))
    xp = jnp.pad(x_nhwc, ((0, 0), (pt, pb), (wl, wr), (0, 0)),
                 mode="constant", constant_values=np.int8(input_zero_point))
    Hp, Wp = H + pt + pb, W + wl + wr
    OH = (Hp - (KH - 1) * dh - 1) // sh + 1
    OW = (Wp - (KW - 1) * dw - 1) // sw + 1
    M = N * OH * OW

    # TODO(synk): fold the (kh, kw) expansion into the reduction grid (Element-offset
    # index_maps on the padded NHWC input) to avoid materializing im2col in HBM at all,
    # and pack small groups (depthwise) along the lane dimension instead of padding
    # OC_g to 128.
    patches = _im2col_nhwc(xp, KH, KW, sh, sw, dh, dw, OH, OW, G, Cin_g)  # [G, M, K] int8

    # Adaptive M tile (large tiles -> MXU-bound); shrink if it would strand a v7x core.
    tm = min(1024, _round_up(max(M, 8), 256))
    Mp = _round_up(M, tm)
    while tm > 256 and G * (Mp // tm) * (OCgp // tn) < 2:
        tm //= 2
        Mp = _round_up(M, tm)

    patches = jnp.pad(patches, ((0, 0), (0, Mp - M), (0, Kp - K)))  # zero pad (exact)

    qmin, qmax = get_quantized_range(feature_bitwidth)
    int8_mxu = _use_int8_mxu()
    n_j = OCgp // tn           # lane-block offset per group in the folded output

    if Kp == tk:
        # Single-k fast path: no accumulator scratch, 3-D parallel grid.
        kernel = _make_singlek_kernel(output_zero_point, qmin, qmax, int8_mxu)
        grid = (G, Mp // tm, OCgp // tn)
        out = pl.pallas_call(
            kernel,
            out_shape=jax.ShapeDtypeStruct((Mp, G * OCgp), jnp.int8),
            grid_spec=pltpu.PrefetchScalarGridSpec(
                num_scalar_prefetch=0,
                grid=grid,
                in_specs=[
                    pl.BlockSpec((1, tm, tk), lambda g, i, j: (g, i, 0)),   # patches
                    pl.BlockSpec((1, tk, tn), lambda g, i, j: (g, 0, j)),   # weight
                    pl.BlockSpec((1, 1, tn), lambda g, i, j: (g, 0, j)),    # bias (f32)
                    pl.BlockSpec((1, 1, tn), lambda g, i, j: (g, 0, j)),    # requant scale
                ],
                out_specs=pl.BlockSpec((tm, tn), lambda g, i, j: (i, g * n_j + j)),
            ),
            compiler_params=pltpu.CompilerParams(
                dimension_semantics=("parallel", "parallel", "parallel"),
                vmem_limit_bytes=32 * 1024 * 1024,
            ),
        )(patches, w_all, bias_all, scale_all)
    else:
        kernel = _make_multik_kernel(output_zero_point, qmin, qmax, int8_mxu)
        grid = (G, Mp // tm, OCgp // tn, Kp // tk)
        out = pl.pallas_call(
            kernel,
            out_shape=jax.ShapeDtypeStruct((Mp, G * OCgp), jnp.int8),
            grid_spec=pltpu.PrefetchScalarGridSpec(
                num_scalar_prefetch=0,
                grid=grid,
                in_specs=[
                    pl.BlockSpec((1, tm, tk), lambda g, i, j, k: (g, i, k)),   # patches
                    pl.BlockSpec((1, tk, tn), lambda g, i, j, k: (g, k, j)),   # weight
                    pl.BlockSpec((1, 1, tn), lambda g, i, j, k: (g, 0, j)),    # bias (f32)
                    pl.BlockSpec((1, 1, tn), lambda g, i, j, k: (g, 0, j)),    # requant scale
                ],
                out_specs=pl.BlockSpec((tm, tn),
                                       lambda g, i, j, k: (i, g * n_j + j)),
                scratch_shapes=[pltpu.VMEM((tm, tn), jnp.int32)],
            ),
            compiler_params=pltpu.CompilerParams(
                dimension_semantics=("parallel", "parallel", "parallel", "arbitrary"),
                vmem_limit_bytes=32 * 1024 * 1024,
            ),
        )(patches, w_all, bias_all, scale_all)

    # Strip pad; no transpose needed thanks to the lane-folded group layout.
    out = out[:M]                                             # [M, G*OCgp]
    if OCgp != OC_g:
        out = out.reshape(M, G, OCgp)[:, :, :OC_g]
    out = out.reshape(N, OH, OW, OC).transpose(0, 3, 1, 2)    # NCHW (module contract)
    return out


class QuantizedConv2dPallas:
    """Mirror of the PyTorch QuantizedConv2d module."""

    def __init__(self, weight, bias, input_zero_point, output_zero_point,
                 input_scale, weight_scale, output_scale,
                 stride, padding, dilation, groups,
                 feature_bitwidth=8, weight_bitwidth=8):
        OC, Cin_g, KH, KW = weight.shape
        G = groups
        OC_g = OC // G
        K = Cin_g * KH * KW

        # GEMM padding / tile selection (done once at construction).
        Kp = _round_up(K, 128)
        tk = _pick_tile(Kp, (512, 384, 256, 128))
        OCgp = _round_up(OC_g, 128)
        tn = _pick_tile(OCgp, (512, 256, 128))

        # Weight: [OC, Cin_g, KH, KW] -> [G, Kp, OCgp] int8 with K ordered (kh, kw, c)
        # to match the NHWC patch layout produced at runtime.
        w = weight.reshape(G, OC_g, Cin_g, KH, KW)
        w = jnp.transpose(w, (0, 3, 4, 2, 1))                  # [G, KH, KW, Cin_g, OC_g]
        w = w.reshape(G, K, OC_g)
        self.w_all = jnp.pad(w, ((0, 0), (0, Kp - K), (0, OCgp - OC_g)))

        # Bias (shifted int32) -> f32, padded to OCgp.
        b = bias if bias is not None else jnp.zeros((OC,), jnp.int32)
        b = b.reshape(G, 1, OC_g).astype(jnp.float32)
        self.bias_all = jnp.pad(b, ((0, 0), (0, 0), (0, OCgp - OC_g)))

        # Per-output-channel requant scale = input_scale * weight_scale / output_scale.
        sc = (jnp.float32(input_scale) * weight_scale.reshape(-1).astype(jnp.float32)
              / jnp.float32(output_scale)).reshape(G, 1, OC_g)
        self.scale_all = jnp.pad(sc, ((0, 0), (0, 0), (0, OCgp - OC_g)))

        self.K, self.Kp, self.tk = K, Kp, tk
        self.OC, self.OC_g, self.OCgp, self.tn = OC, OC_g, OCgp, tn
        self.KH, self.KW = KH, KW

        self.input_zero_point = input_zero_point
        self.output_zero_point = output_zero_point
        self.input_scale = input_scale
        self.weight_scale = weight_scale
        self.output_scale = output_scale
        self.stride = stride
        # same convention as the PyTorch module: (Wl, Wr, Ht, Hb)
        self.padding = (padding[1], padding[1], padding[0], padding[0])
        self.dilation = dilation
        self.groups = groups
        self.feature_bitwidth = feature_bitwidth
        self.weight_bitwidth = weight_bitwidth

    def __call__(self, x):
        return quantized_conv2d_pallas(
            x, self.w_all, self.bias_all, self.scale_all,
            K=self.K, Kp=self.Kp, tk=self.tk,
            OC=self.OC, OC_g=self.OC_g, OCgp=self.OCgp, tn=self.tn,
            KH=self.KH, KW=self.KW,
            stride=self.stride, padding=self.padding, dilation=self.dilation,
            groups=self.groups,
            input_zero_point=self.input_zero_point,
            output_zero_point=self.output_zero_point,
            feature_bitwidth=self.feature_bitwidth)


def _reference_numpy(x, weight, bias, feature_bitwidth, input_zero_point,
                     output_zero_point, input_scale, weight_scale, output_scale,
                     stride, padding, dilation, groups):
    """Exact integer reference (mimics the PyTorch CPU path), numpy only."""
    x = np.asarray(x, dtype=np.int64)
    w = np.asarray(weight, dtype=np.int64)
    b = np.asarray(bias, dtype=np.int64)
    N, Cin, H, W = x.shape
    OC, Cin_g, KH, KW = w.shape
    sh, sw = stride
    dh, dw = dilation
    wl, wr, pt, pb = padding
    xp = np.pad(x, ((0, 0), (0, 0), (pt, pb), (wl, wr)),
                mode="constant", constant_values=input_zero_point)
    Hp, Wp = xp.shape[2], xp.shape[3]
    OH = (Hp - (KH - 1) * dh - 1) // sh + 1
    OW = (Wp - (KW - 1) * dw - 1) // sw + 1
    OC_g = OC // groups
    out = np.zeros((N, OC, OH, OW), dtype=np.int64)
    for g in range(groups):
        for oc in range(g * OC_g, (g + 1) * OC_g):
            for oh in range(OH):
                for ow in range(OW):
                    patch = xp[:, g * Cin_g:(g + 1) * Cin_g,
                               oh * sh: oh * sh + (KH - 1) * dh + 1: dh,
                               ow * sw: ow * sw + (KW - 1) * dw + 1: dw]
                    out[:, oc, oh, ow] = np.einsum("nchw,chw->n", patch, w[oc])
    out = out + b.reshape(1, -1, 1, 1)
    outf = out.astype(np.float32)
    sc = (np.float32(input_scale) * np.asarray(weight_scale, np.float32).reshape(1, -1, 1, 1)
          / np.float32(output_scale))
    outf = outf * sc
    outf = outf + np.float32(output_zero_point)
    qmin, qmax = get_quantized_range(feature_bitwidth)
    outf = np.clip(np.round(outf), qmin, qmax)
    return outf.astype(np.int8)


def _run_case(key, N, Cin, H, W, OC, KH, KW, stride, padding_hw, dilation, groups):
    k1, k2, k3, k4 = jax.random.split(key, 4)
    x = jax.random.randint(k1, (N, Cin, H, W), -128, 128, dtype=jnp.int32).astype(jnp.int8)
    weight = jax.random.randint(k2, (OC, Cin // groups, KH, KW), -127, 128,
                                dtype=jnp.int32).astype(jnp.int8)
    bias = jax.random.randint(k3, (OC,), -1000, 1000, dtype=jnp.int32)
    weight_scale = jax.random.uniform(k4, (OC,), jnp.float32, 0.01, 0.1)

    input_zero_point = 3
    output_zero_point = -5
    input_scale = 0.05
    output_scale = 0.1

    mod = QuantizedConv2dPallas(weight, bias, input_zero_point, output_zero_point,
                                input_scale, weight_scale, output_scale,
                                stride, padding_hw, dilation, groups)
    out = jax.block_until_ready(mod(x))

    ref = _reference_numpy(x, weight, bias, 8, input_zero_point, output_zero_point,
                           input_scale, weight_scale, output_scale,
                           stride, mod.padding, dilation, groups)
    np.testing.assert_array_equal(np.asarray(out), ref)


if __name__ == "__main__":
    key = jax.random.PRNGKey(0)
    key1, key2, key3 = jax.random.split(key, 3)

    # Case 1: standard conv, groups=1 (single-k fast path).
    _run_case(key1, N=2, Cin=4, H=16, W=16, OC=8, KH=3, KW=3,
              stride=(1, 1), padding_hw=(1, 1), dilation=(1, 1), groups=1)

    # Case 2: grouped, strided conv (exercises the group grid axis / lane-folded output).
    _run_case(key2, N=1, Cin=4, H=8, W=8, OC=8, KH=3, KW=3,
              stride=(2, 2), padding_hw=(1, 1), dilation=(1, 1), groups=2)

    # Case 3: larger Cin so Kp > tk (exercises the multi-k int32-accumulator kernel).
    _run_case(key3, N=1, Cin=64, H=8, W=8, OC=64, KH=3, KW=3,
              stride=(1, 1), padding_hw=(1, 1), dilation=(1, 1), groups=1)

    print("KERNEL_OK")
</pallas_src>

<mosaic_0001>
module attributes {stable_mosaic.version = 11 : i64} {
  func.func @kernel(%arg0: i32, %arg1: i32, %arg2: i32, %arg3: memref<1x256x128xi8, #tpu.memory_space<vmem>>, %arg4: memref<1x128x128xi8, #tpu.memory_space<vmem>>, %arg5: memref<1x1x128xf32, #tpu.memory_space<vmem>>, %arg6: memref<1x1x128xf32, #tpu.memory_space<vmem>>, %arg7: memref<256x128xi8, #tpu.memory_space<vmem>>) attributes {dimension_semantics = [#tpu.dimension_semantics<parallel>, #tpu.dimension_semantics<parallel>, #tpu.dimension_semantics<parallel>], iteration_bounds = array<i64: 1, 2, 1>, scalar_prefetch = 0 : i64, scratch_operands = 0 : i64, tpu.core_type = #tpu.core_type<tc>, window_params = [{transform_indices = @transform_0, window_bounds = array<i64: 1, 256, 128>}, {transform_indices = @transform_1, window_bounds = array<i64: 1, 128, 128>}, {transform_indices = @transform_2, window_bounds = array<i64: 1, 1, 128>}, {transform_indices = @transform_3, window_bounds = array<i64: 1, 1, 128>}, {transform_indices = @transform_4, window_bounds = array<i64: 256, 128>}]} {
    %c0 = arith.constant 0 : index
    %c0_0 = arith.constant 0 : index
    %c0_1 = arith.constant 0 : index
    %0 = vector.load %arg3[%c0, %c0_0, %c0_1] : memref<1x256x128xi8, #tpu.memory_space<vmem>>, vector<1x256x128xi8>
    %1 = vector.shape_cast %0 : vector<1x256x128xi8> to vector<256x128xi8>
    %2 = arith.sitofp %1 : vector<256x128xi8> to vector<256x128xbf16>
    %c0_2 = arith.constant 0 : index
    %c0_3 = arith.constant 0 : index
    %c0_4 = arith.constant 0 : index
    %3 = vector.load %arg4[%c0_2, %c0_3, %c0_4] : memref<1x128x128xi8, #tpu.memory_space<vmem>>, vector<1x128x128xi8>
    %4 = vector.shape_cast %3 : vector<1x128x128xi8> to vector<128x128xi8>
    %5 = arith.sitofp %4 : vector<128x128xi8> to vector<128x128xbf16>
    %cst = arith.constant dense<0.000000e+00> : vector<256x128xf32>
    %6 = tpu.matmul %2, %5, %cst {dimension_numbers = #tpu.dot_dimension_numbers<[1], [0], [0], [1], [0, 0, 1, 1], [], []>} : vector<256x128xbf16>, vector<128x128xbf16>, vector<256x128xf32> -> vector<256x128xf32>
    %c0_5 = arith.constant 0 : index
    %c0_6 = arith.constant 0 : index
    %c0_7 = arith.constant 0 : index
    %7 = vector.load %arg5[%c0_5, %c0_6, %c0_7] : memref<1x1x128xf32, #tpu.memory_space<vmem>>, vector<1x1x128xf32>
    %8 = vector.shape_cast %7 : vector<1x1x128xf32> to vector<1x128xf32>
    %c0_8 = arith.constant 0 : index
    %c0_9 = arith.constant 0 : index
    %c0_10 = arith.constant 0 : index
    %9 = vector.load %arg6[%c0_8, %c0_9, %c0_10] : memref<1x1x128xf32, #tpu.memory_space<vmem>>, vector<1x1x128xf32>
    %10 = vector.shape_cast %9 : vector<1x1x128xf32> to vector<1x128xf32>
    %11 = vector.broadcast %8 : vector<1x128xf32> to vector<256x128xf32>
    %12 = arith.addf %6, %11 : vector<256x128xf32>
    %13 = vector.broadcast %10 : vector<1x128xf32> to vector<256x128xf32>
    %14 = arith.mulf %12, %13 : vector<256x128xf32>
    %cst_11 = arith.constant -5.000000e+00 : f32
    %15 = vector.broadcast %cst_11 : f32 to vector<256x128xf32>
    %16 = arith.addf %14, %15 : vector<256x128xf32>
    %17 = math.roundeven %16 : vector<256x128xf32>
    %cst_12 = arith.constant -1.280000e+02 : f32
    %cst_13 = arith.constant 1.270000e+02 : f32
    %18 = vector.broadcast %cst_12 : f32 to vector<256x128xf32>
    %19 = arith.maximumf %18, %17 : vector<256x128xf32>
    %20 = vector.broadcast %cst_13 : f32 to vector<256x128xf32>
    %21 = arith.minimumf %20, %19 : vector<256x128xf32>
    %22 = arith.fptosi %21 : vector<256x128xf32> to vector<256x128xi8>
    %c0_14 = arith.constant 0 : index
    %c0_15 = arith.constant 0 : index
    %23 = vector.load %arg7[%c0_14, %c0_15] : memref<256x128xi8, #tpu.memory_space<vmem>>, vector<256x128xi8>
    tpu.vector_store %arg7[%c0_14, %c0_15], %22 {strides = array<i32>} : memref<256x128xi8, #tpu.memory_space<vmem>>, vector<256x128xi8>,
    return
  }
  func.func @transform_0(%arg0: i32, %arg1: i32, %arg2: i32) -> (i32, i32, i32) {
    %c0_i32 = arith.constant 0 : i32
    %c0_i32_0 = arith.constant 0 : i32
    return %arg0, %arg1, %c0_i32 : i32, i32, i32
  }
  func.func @transform_1(%arg0: i32, %arg1: i32, %arg2: i32) -> (i32, i32, i32) {
    %c0_i32 = arith.constant 0 : i32
    %c0_i32_0 = arith.constant 0 : i32
    return %arg0, %c0_i32, %arg2 : i32, i32, i32
  }
  func.func @transform_2(%arg0: i32, %arg1: i32, %arg2: i32) -> (i32, i32, i32) {
    %c0_i32 = arith.constant 0 : i32
    %c0_i32_0 = arith.constant 0 : i32
    return %arg0, %c0_i32, %arg2 : i32, i32, i32
  }
  func.func @transform_3(%arg0: i32, %arg1: i32, %arg2: i32) -> (i32, i32, i32) {
    %c0_i32 = arith.constant 0 : i32
    %c0_i32_0 = arith.constant 0 : i32
    return %arg0, %c0_i32, %arg2 : i32, i32, i32
  }
  func.func @transform_4(%arg0: i32, %arg1: i32, %arg2: i32) -> (i32, i32) {
    %c1_i32 = arith.constant 1 : i32
    %0 = arith.muli %arg0, %c1_i32 : i32
    %1 = arith.addi %0, %arg2 : i32
    %c0_i32 = arith.constant 0 : i32
    return %arg1, %1 : i32, i32
  }
}

</mosaic_0001>

<llo_original>
// kernel: tpu_custom_call.1
$region0: #{tpu_custom_call.1}
  #allocation0 [shape = 'u32[]', space=smem, size = 0x4, offset = 0x4, fixed_abs, tag = 'smem constant byte address 0x4 - core index']
  #allocation1 [shape = 'u32[144,128]{1,0:T(1,128)}', space=vmem, size = 0x12000, scoped, tag = 'internal scratch']
  %s0 = inlined_call_operand.hbm [shape: s8[1,512,128], index: 0, kind: input, shape index: {}]
  %s1 = inlined_call_operand.hbm [shape: s8[1,128,128], index: 1, kind: input, shape index: {}]
  %s2 = inlined_call_operand.vmem [shape: f32[1,1,128], index: 2, kind: input, shape index: {}]
  %s3 = inlined_call_operand.vmem [shape: f32[1,1,128], index: 3, kind: input, shape index: {}]
  %s4 = inlined_call_operand.hbm [shape: s8[512,128], index: 4, kind: output, shape index: {}]
  %s5 = sld [smem:[#allocation0]]
  $region57: #{tpu_custom_call.1} parent=0
    _
  %s7 = ssub.s32 1, %s5
  %s8 = scalar_select 0, %s7, %s5
  $region1: #{tpu_custom_call.1} parent=0
    #allocation2 [shape = 'u8[65536]{0}', space=vmem, size = 0x10000, scoped, tag = 'input window, operand 0']
    #allocation3 [shape = 's32[2]{0}', space=sflag, size = 0x8, scoped, tag = 'scoped memory for tpu_custom_call.1']
    #allocation4 [shape = 's32[2]{0}', space=sflag, size = 0x8, scoped, tag = 'scoped memory for tpu_custom_call.1']
    #allocation5 [shape = 'u8[16384]{0}', space=vmem, size = 0x4000, scoped, tag = 'input window, operand 1, single buffered']
    #allocation6 [shape = 's32[1]{0}', space=sflag, size = 0x4, scoped, tag = 'scoped memory for tpu_custom_call.1']
    #allocation7 [shape = 'u8[65536]{0}', space=vmem, size = 0x10000, scoped, tag = 'output window, operand 0']
    %9 = vsyncpa [#allocation3], 0
    %s10 = scalar_lea.sflag [#allocation3], 1
    %11 = vsyncpa %s10, 0
    %12 = vsyncpa [#allocation6], 0
    %13 = vsyncpa [#allocation4], 0
    %s14 = scalar_lea.sflag [#allocation4], 1
    %15 = vsyncpa %s14, 0
    loop: start=0, step=1, limit=4
    $region2: #{tpu_custom_call.1} parent=1 // loop_pre_header
      _
    $region3: #{tpu_custom_call.1} parent=1 // loop_header
      %s17 = sphi 0, %s21
      %p18 = scmp.ge.s32.totalorder %s17, 4
      %s24 = sphi 0, %s43
      %s25 = sphi 0, %s39
      %s26 = sphi 0, %s35
      %s27 = sphi 0, %s24
      %s28 = sphi 0, %s25
      %s29 = sphi 0, %s26
      %s30 = sphi 0, %s27
      %s31 = sphi 0, %s28
      %s32 = sphi 0, %s29
      %s48 = sphi 0, %s50
      %s51 = sphi 0, %s48
      %s52 = sphi 0, %s51
      %s68 = sphi 0, %s52
      %s76 = sphi 0, %s78
      %s79 = sphi 0, %s76
      %s80 = sphi 0, %s79
      %s96 = sphi 0, %s80
      %s104 = sphi 0, %s106
      %s107 = sphi 0, %s104
      %s108 = sphi 0, %s107
      %s124 = sphi 0, %s108
      %s132 = sphi 0, %s134
      %s135 = sphi 0, %s132
      %s136 = sphi 0, %s135
      %s152 = sphi 0, %s136
      %s162 = sphi 0, %s164
      %s165 = sphi 0, %s162
      %s166 = sphi 0, %s165
      %s182 = sphi 0, %s166
    $region4: #{tpu_custom_call.1} parent=1 // loop_header_branch
      %20 = sbr.rel (%p18) target = $region8
    $region5: #{tpu_custom_call.1} parent=1 // loop_body
      %s22 = ssub.s32 %s17, 1
      %s23 = ssub.s32 %s17, 2
      %s33 = sadd.s32 1, %s26
      %p34 = scmp.ge.s32.totalorder %s33, 1
      %s35 = scalar_select %p34, 0, %s33
      %s36 = sadd.s32 1, %s25
      %s37 = scalar_select %p34, %s36, %s25
      %p38 = scmp.ge.s32.totalorder %s37, 2
      %s39 = scalar_select %p38, 0, %s37
      %s40 = sadd.s32 1, %s24
      %s41 = scalar_select %p38, %s40, %s24
      %p42 = scmp.ge.s32.totalorder %s41, 1
      %s43 = scalar_select %p42, 0, %s41
      %s44 = ssub.s32 %s24, %s43
      %s45 = ssub.s32 %s25, %s39
      %s46 = sor.u32 %s44, %s45
      %p47 = scmp.eq.s32.totalorder %s46, 0
      %s49 = sadd.s32 %s48, 1
      %s50 = scalar_select %p47, %s48, %s49
      %p53 = pneg %p47
      %p54 = scmp.eq.s32.totalorder %s17, 1
      %p55 = por %p53, %p54
      %p56 = scmp.ne.s32.totalorder %s48, %s51
      %p57 = scmp.eq.s32.totalorder %s17, 0
      %p58 = por %p56, %p57
      %p59 = scmp.ne.s32.totalorder %s48, %s51
      %p60 = scmp.eq.s32.totalorder %s22, 1
      %p61 = por %p59, %p60
      %p62 = scmp.ne.s32.totalorder %s51, %s52
      %p63 = scmp.eq.s32.totalorder %s22, 0
      %p64 = por %p62, %p63
      %p65 = scmp.ne.s32.totalorder %s51, %s52
      %p66 = scmp.eq.s32.totalorder %s23, 1
      %p67 = por %p65, %p66
      %p69 = scmp.ne.s32.totalorder %s52, %s68
      %p70 = scmp.eq.s32.totalorder %s23, 0
      %p71 = por %p69, %p70
      %s72 = ssub.s32 %s24, %s43
      %s73 = ssub.s32 %s26, %s35
      %s74 = sor.u32 %s72, %s73
      %p75 = scmp.eq.s32.totalorder %s74, 0
      %s77 = sadd.s32 %s76, 1
      %s78 = scalar_select %p75, %s76, %s77
      %p81 = pneg %p75
      %p82 = scmp.eq.s32.totalorder %s17, 1
      %p83 = por %p81, %p82
      %p84 = scmp.ne.s32.totalorder %s76, %s79
      %p85 = scmp.eq.s32.totalorder %s17, 0
      %p86 = por %p84, %p85
      %p87 = scmp.ne.s32.totalorder %s76, %s79
      %p88 = scmp.eq.s32.totalorder %s22, 1
      %p89 = por %p87, %p88
      %p90 = scmp.ne.s32.totalorder %s79, %s80
      %p91 = scmp.eq.s32.totalorder %s22, 0
      %p92 = por %p90, %p91
      %p93 = scmp.ne.s32.totalorder %s79, %s80
      %p94 = scmp.eq.s32.totalorder %s23, 1
      %p95 = por %p93, %p94
      %p97 = scmp.ne.s32.totalorder %s80, %s96
      %p98 = scmp.eq.s32.totalorder %s23, 0
      %p99 = por %p97, %p98
      %s100 = ssub.s32 %s24, %s43
      %s101 = ssub.s32 %s26, %s35
      %s102 = sor.u32 %s100, %s101
      %p103 = scmp.eq.s32.totalorder %s102, 0
      %s105 = sadd.s32 %s104, 1
      %s106 = scalar_select %p103, %s104, %s105
      %p109 = pneg %p103
      %p110 = scmp.eq.s32.totalorder %s17, 1
      %p111 = por %p109, %p110
      %p112 = scmp.ne.s32.totalorder %s104, %s107
      %p113 = scmp.eq.s32.totalorder %s17, 0
      %p114 = por %p112, %p113
      %p115 = scmp.ne.s32.totalorder %s104, %s107
      %p116 = scmp.eq.s32.totalorder %s22, 1
      %p117 = por %p115, %p116
      %p118 = scmp.ne.s32.totalorder %s107, %s108
      %p119 = scmp.eq.s32.totalorder %s22, 0
      %p120 = por %p118, %p119
      %p121 = scmp.ne.s32.totalorder %s107, %s108
      %p122 = scmp.eq.s32.totalorder %s23, 1
      %p123 = por %p121, %p122
      %p125 = scmp.ne.s32.totalorder %s108, %s124
      %p126 = scmp.eq.s32.totalorder %s23, 0
      %p127 = por %p125, %p126
      %s128 = ssub.s32 %s24, %s43
      %s129 = ssub.s32 %s26, %s35
      %s130 = sor.u32 %s128, %s129
      %p131 = scmp.eq.s32.totalorder %s130, 0
      %s133 = sadd.s32 %s132, 1
      %s134 = scalar_select %p131, %s132, %s133
      %p137 = pneg %p131
      %p138 = scmp.eq.s32.totalorder %s17, 1
      %p139 = por %p137, %p138
      %p140 = scmp.ne.s32.totalorder %s132, %s135
      %p141 = scmp.eq.s32.totalorder %s17, 0
      %p142 = por %p140, %p141
      %p143 = scmp.ne.s32.totalorder %s132, %s135
      %p144 = scmp.eq.s32.totalorder %s22, 1
      %p145 = por %p143, %p144
      %p146 = scmp.ne.s32.totalorder %s135, %s136
      %p147 = scmp.eq.s32.totalorder %s22, 0
      %p148 = por %p146, %p147
      %p149 = scmp.ne.s32.totalorder %s135, %s136
      %p150 = scmp.eq.s32.totalorder %s23, 1
      %p151 = por %p149, %p150
      %p153 = scmp.ne.s32.totalorder %s136, %s152
      %p154 = scmp.eq.s32.totalorder %s23, 0
      %p155 = por %p153, %p154
      %s156 = sadd.s32 %s24, %s26
      %s157 = sadd.s32 %s43, %s35
      %s158 = ssub.s32 %s25, %s39
      %s159 = ssub.s32 %s156, %s157
      %s160 = sor.u32 %s158, %s159
      %p161 = scmp.eq.s32.totalorder %s160, 0
      %s163 = sadd.s32 %s162, 1
      %s164 = scalar_select %p161, %s162, %s163
      %p167 = pneg %p161
      %p168 = scmp.eq.s32.totalorder %s17, 1
      %p169 = por %p167, %p168
      %p170 = scmp.ne.s32.totalorder %s162, %s165
      %p171 = scmp.eq.s32.totalorder %s17, 0
      %p172 = por %p170, %p171
      %p173 = scmp.ne.s32.totalorder %s162, %s165
      %p174 = scmp.eq.s32.totalorder %s22, 1
      %p175 = por %p173, %p174
      %p176 = scmp.ne.s32.totalorder %s165, %s166
      %p177 = scmp.eq.s32.totalorder %s22, 0
      %p178 = por %p176, %p177
      %p179 = scmp.ne.s32.totalorder %s165, %s166
      %p180 = scmp.eq.s32.totalorder %s23, 1
      %p181 = por %p179, %p180
      %p183 = scmp.ne.s32.totalorder %s166, %s182
      %p184 = scmp.eq.s32.totalorder %s23, 0
      %p185 = por %p183, %p184
      %p186 = scmp.le.s32.totalorder 1, %s17
      %p187 = scmp.lt.s32.totalorder %s17, 3
      %p188 = pnand %p186, %p187
      %p189 = pneg %p188
      // Predicated region
      $region9: #{tpu_custom_call.1} parent=5 // pred_check
        _
      $region10: #{tpu_custom_call.1} parent=5 // pred_check_branch
        %191 = sbr.rel (%p188) target = $region12
      $region11: #{tpu_custom_call.1} parent=5 // pred_region
        %s192 = ssub.s32 %s17, 1
        // Predicated region
        $region13: #{tpu_custom_call.1} parent=11 // pred_check
          %p193 = pneg %p92
        $region14: #{tpu_custom_call.1} parent=11 // pred_check_branch
          %195 = sbr.rel (%p193) target = $region16
        $region15: #{tpu_custom_call.1} parent=11 // pred_region
          %s197 = ssub.s32 512, 512
          %198 = vsyncadd [#allocation6], %s197
          %s199 = smul.addr %s27, 4
          %s200 = sadd.s32 %s29, %s199
          %s201 = smul.addr %s200, 128
          %s202 = scalar_lea.hbm %s1, %s201
          %s203 = sshll.u32 [#allocation5], 4
          %s204 = int_to_ptr.vmem [resolvable:$true] %s203
          %209 = dma.hbm_to_vmem [thread:$0]  %s202, 512, %s204, [#allocation6], 128, 128, 8
        $region16: #{tpu_custom_call.1} parent=11 // pred_fallthru
          _
        // Predicated region
        $region17: #{tpu_custom_call.1} parent=11 // pred_check
          %p210 = pneg %p120
        $region18: #{tpu_custom_call.1} parent=11 // pred_check_branch
          %212 = sbr.rel (%p210) target = $region20
        $region19: #{tpu_custom_call.1} parent=11 // pred_region
          %p213 = scmp.lt.s32.totalorder %s27, 0
          %s214 = scalar_select %p213, %s27, 0
          %p215 = scmp.lt.s32.totalorder %s29, 0
          %s216 = scalar_select %p215, %s29, 0
          %s217 = sadd.s32 %s216, %s214
          %s218 = scalar_lea.vmem %s2, %s217
        $region20: #{tpu_custom_call.1} parent=11 // pred_fallthru
          _
        // Predicated region
        $region21: #{tpu_custom_call.1} parent=11 // pred_check
          %p219 = pneg %p148
        $region22: #{tpu_custom_call.1} parent=11 // pred_check_branch
          %221 = sbr.rel (%p219) target = $region24
        $region23: #{tpu_custom_call.1} parent=11 // pred_region
          %p222 = scmp.lt.s32.totalorder %s27, 0
          %s223 = scalar_select %p222, %s27, 0
          %p224 = scmp.lt.s32.totalorder %s29, 0
          %s225 = scalar_select %p224, %s29, 0
          %s226 = sadd.s32 %s225, %s223
          %s227 = scalar_lea.vmem %s3, %s226
        $region24: #{tpu_custom_call.1} parent=11 // pred_fallthru
          _
      $region12: #{tpu_custom_call.1} parent=5 // pred_fallthru
        _
      %p228 = scmp.lt.s32.totalorder %s17, 2
      // Predicated region
      $region25: #{tpu_custom_call.1} parent=5 // pred_check
        %p229 = pneg %p228
      $region26: #{tpu_custom_call.1} parent=5 // pred_check_branch
        %231 = sbr.rel (%p229) target = $region28
      $region27: #{tpu_custom_call.1} parent=5 // pred_region
        // Predicated region
        $region29: #{tpu_custom_call.1} parent=27 // pred_check
          %p232 = pneg %p58
        $region30: #{tpu_custom_call.1} parent=27 // pred_check_branch
          %234 = sbr.rel (%p232) target = $region32
        $region31: #{tpu_custom_call.1} parent=27 // pred_region
          %s235 = sand.u32 %s48, 1
          %s236 = scalar_lea.sflag [#allocation3], %s235
          %s237 = sand.u32 %s48, 1
          %s238 = smul.addr %s237, 64
          %s239 = scalar_lea.vmem [#allocation2], %s238
          %s240 = smul.u32 8, %s25
          %s242 = ssub.s32 1024, 1024
          %243 = vsyncadd %s236, %s242
          %s244 = smul.addr %s24, 16
          %s245 = sadd.s32 %s240, %s244
          %s246 = smul.addr %s245, 128
          %s247 = scalar_lea.hbm %s0, %s246
          %s248 = sshll.u32 %s239, 4
          %s249 = int_to_ptr.vmem [resolvable:$true] %s248
          %254 = dma.hbm_to_vmem [thread:$0]  %s247, 1024, %s249, %s236, 128, 128, 8
        $region32: #{tpu_custom_call.1} parent=27 // pred_fallthru
          _
      $region28: #{tpu_custom_call.1} parent=5 // pred_fallthru
        _
      %p255 = scmp.le.s32.totalorder 1, %s17
      %p256 = scmp.lt.s32.totalorder %s17, 3
      %p257 = pnand %p255, %p256
      %p258 = pneg %p257
      // Predicated region
      $region33: #{tpu_custom_call.1} parent=5 // pred_check
        _
      $region34: #{tpu_custom_call.1} parent=5 // pred_check_branch
        %260 = sbr.rel (%p257) target = $region36
      $region35: #{tpu_custom_call.1} parent=5 // pred_region
        %s261 = ssub.s32 %s17, 1
        %s262 = sand.u32 %s51, 1
        %s263 = scalar_lea.sflag [#allocation3], %s262
        %s264 = sand.u32 %s51, 1
        %s265 = smul.addr %s264, 64
        %s266 = scalar_lea.vmem [#allocation2], %s265
        // Predicated region
        $region37: #{tpu_custom_call.1} parent=35 // pred_check
          %p267 = pneg %p64
        $region38: #{tpu_custom_call.1} parent=35 // pred_check_branch
          %269 = sbr.rel (%p267) target = $region40
        $region39: #{tpu_custom_call.1} parent=35 // pred_region
          %270 = dma.done %s263, 1024
        $region40: #{tpu_custom_call.1} parent=35 // pred_fallthru
          _
        // Predicated region
        $region41: #{tpu_custom_call.1} parent=35 // pred_check
          %p271 = pneg %p92
        $region42: #{tpu_custom_call.1} parent=35 // pred_check_branch
          %273 = sbr.rel (%p271) target = $region44
        $region43: #{tpu_custom_call.1} parent=35 // pred_region
          %274 = dma.done [#allocation6], 512
        $region44: #{tpu_custom_call.1} parent=35 // pred_fallthru
          _
        %s275 = sand.u32 %s51, 1
        %s276 = scalar_lea.sflag [#allocation3], %s275
        %s277 = sand.u32 %s51, 1
        %s278 = smul.addr %s277, 64
        %s279 = scalar_lea.vmem [#allocation2], %s278
        %p280 = pneg %p64
        %p281 = pneg %p61
        %p282 = pneg %p92
        %p283 = pneg %p89
        %p284 = scmp.lt.s32.totalorder %s27, 0
        %s285 = scalar_select %p284, %s27, 0
        %p286 = scmp.lt.s32.totalorder %s29, 0
        %s287 = scalar_select %p286, %s29, 0
        %s288 = sadd.s32 %s287, %s285
        %s289 = scalar_lea.vmem %s2, %s288
        %p290 = pneg %p120
        %p291 = pneg %p117
        %p292 = scmp.lt.s32.totalorder %s27, 0
        %s293 = scalar_select %p292, %s27, 0
        %p294 = scmp.lt.s32.totalorder %s29, 0
        %s295 = scalar_select %p294, %s29, 0
        %s296 = sadd.s32 %s295, %s293
        %s297 = scalar_lea.vmem %s3, %s296
        %p298 = pneg %p148
        %p299 = pneg %p145
        %p300 = pneg %p178
        %p301 = pneg %p175
        %s302 = sand.u32 %s165, 1
        %s303 = scalar_lea.sflag [#allocation4], %s302
        %s304 = sand.u32 %s165, 1
        %s305 = smul.addr %s304, 64
        %s306 = scalar_lea.vmem [#allocation7], %s305
        %s307 = smul.u32 8, %s28
        %p308 = scmp.lt.s32.totalorder %s27, 0
        %s309 = scalar_select %p308, %s27, 0
        %p310 = scmp.lt.s32.totalorder %s29, 0
        %s311 = scalar_select %p310, %s29, 0
        %s312 = sadd.s32 %s311, %s309
        %s313 = scalar_lea.vmem %s2, %s312
        %p314 = scmp.lt.s32.totalorder %s27, 0
        %s315 = scalar_select %p314, %s27, 0
        %p316 = scmp.lt.s32.totalorder %s29, 0
        %s317 = scalar_select %p316, %s29, 0
        %s318 = sadd.s32 %s317, %s315
        %s319 = scalar_lea.vmem %s3, %s318
        %s320 = sadd.s32 %s27, %s29
        %s321 = smul.u32 8, %s28
        %v323 = vld [vmem:[%s266] sm:$0xff]
        %v324 = vld [vmem:[%s266 + $0x8] sm:$0xff]
        %v325 = vld [vmem:[%s266 + $0x10] sm:$0xff]
        %v326 = vld [vmem:[%s266 + $0x18] sm:$0xff]
        %v327 = vld [vmem:[%s266 + $0x20] sm:$0xff]
        %v328 = vld [vmem:[%s266 + $0x28] sm:$0xff]
        %v329 = vld [vmem:[%s266 + $0x30] sm:$0xff]
        %v330 = vld [vmem:[%s266 + $0x38] sm:$0xff]
        %v331 = vunpack.c.l.s8.bf16 %v323
        %v332 = vunpack.c.h.s8.bf16 %v323
        %v333 = vunpack.c.l.s8.bf16 %v324
        %v334 = vunpack.c.h.s8.bf16 %v324
        %v335 = vunpack.c.l.s8.bf16 %v325
        %v336 = vunpack.c.h.s8.bf16 %v325
        %v337 = vunpack.c.l.s8.bf16 %v326
        %v338 = vunpack.c.h.s8.bf16 %v326
        %v339 = vunpack.c.l.s8.bf16 %v327
        %v340 = vunpack.c.h.s8.bf16 %v327
        %v341 = vunpack.c.l.s8.bf16 %v328
        %v342 = vunpack.c.h.s8.bf16 %v328
        %v343 = vunpack.c.l.s8.bf16 %v329
        %v344 = vunpack.c.h.s8.bf16 %v329
        %v345 = vunpack.c.l.s8.bf16 %v330
        %v346 = vunpack.c.h.s8.bf16 %v330
        %v347 = vld [vmem:[#allocation5] sm:$0xff]
        %v348 = vld [vmem:[#allocation5 + $0x8] sm:$0xff]
        %v349 = vld [vmem:[#allocation5 + $0x10] sm:$0xff]
        %v350 = vld [vmem:[#allocation5 + $0x18] sm:$0xff]
        %v351 = vunpack.c.l.s8.bf16 %v347
        %v352 = vunpack.c.h.s8.bf16 %v347
        %v353 = vunpack.c.l.s8.bf16 %v348
        %v354 = vunpack.c.h.s8.bf16 %v348
        %v355 = vunpack.c.l.s8.bf16 %v349
        %v356 = vunpack.c.h.s8.bf16 %v349
        %v357 = vunpack.c.l.s8.bf16 %v350
        %v358 = vunpack.c.h.s8.bf16 %v350
        %v359 = vld [vmem:[%s313] sm:$0x1]
        %v360 = vld [vmem:[%s319] sm:$0x1]
        %v362 = vlaneseq
        %v363 = vshrl.u32 %v362, 7
        %v364 = vsub.s32 0, %v363
        %v365 = vrot.slane %v359, %v364
        %367 = vmatprep.subr.bf16.mxu0 0
        %368 = vmatpush1.bf16.msra.mxu0 %v351
        %369 = vmatprep.subr.bf16.mxu0 0
        %370 = vmatpush1.bf16.msra.mxu0 %v352
        %371 = vmatprep.subr.bf16.mxu0 0
        %372 = vmatpush1.bf16.msra.mxu0 %v353
        %373 = vmatprep.subr.bf16.mxu0 0
        %374 = vmatpush1.bf16.msra.mxu0 %v354
        %375 = vmatprep.subr.bf16.mxu0 0
        %376 = vmatpush1.bf16.msra.mxu0 %v355
        %377 = vmatprep.subr.bf16.mxu0 0
        %378 = vmatpush1.bf16.msra.mxu0 %v356
        %379 = vmatprep.subr.bf16.mxu0 0
        %380 = vmatpush1.bf16.msra.mxu0 %v357
        %381 = vmatprep.subr.bf16.mxu0 0
        %382 = vmatpush1.bf16.msra.mxu0 %v358
        %383 = vmatprep.subr.bf16.mxu0 0
        %384 = vmatpush1.bf16.msra.mxu0 0
        %385 = vmatprep.subr.bf16.mxu0 0
        %386 = vmatpush1.bf16.msra.mxu0 0
        %387 = vmatprep.subr.bf16.mxu0 0
        %388 = vmatpush1.bf16.msra.mxu0 0
        %389 = vmatprep.subr.bf16.mxu0 0
        %390 = vmatpush1.bf16.msra.mxu0 0
        %391 = vmatprep.subr.bf16.mxu0 0
        %392 = vmatpush1.bf16.msra.mxu0 0
        %393 = vmatprep.subr.bf16.mxu0 0
        %394 = vmatpush1.bf16.msra.mxu0 0
        %395 = vmatprep.subr.bf16.mxu0 0
        %396 = vmatpush1.bf16.msra.mxu0 0
        %397 = vmatprep.subr.bf16.mxu0 0
        %398 = vmatpush1.bf16.msra.mxu0 0
        %399 = vmatprep.mubr.bf16.mxu0 0
        %400 = vmatmul.mubr.bf16.gmra.mrb[0].mxu0 %v331
        %v401 = vpop.f32.mrb[0].mxu0
        %v402 = vadd.f32 %v365, %v401
        %v403 = vpop.f32.mrb[0].mxu0
        %v404 = vpop.f32.mrb[0].mxu0
        %v405 = vadd.f32 %v365, %v404
        %v406 = vpop.f32.mrb[0].mxu0
        %407 = vmatprep.mubr.bf16.mxu0 0
        %408 = vmatmul.mubr.bf16.gmra.mrb[0].mxu0 %v332
        %v409 = vpop.f32.mrb[0].mxu0
        %v410 = vadd.f32 %v365, %v409
        %v411 = vpop.f32.mrb[0].mxu0
        %v412 = vpop.f32.mrb[0].mxu0
        %v413 = vadd.f32 %v365, %v412
        %v414 = vpop.f32.mrb[0].mxu0
        %415 = vmatprep.mubr.bf16.mxu0 0
        %416 = vmatmul.mubr.bf16.gmra.mrb[0].mxu0 %v333
        %v417 = vpop.f32.mrb[0].mxu0
        %v418 = vadd.f32 %v365, %v417
        %v419 = vpop.f32.mrb[0].mxu0
        %v420 = vpop.f32.mrb[0].mxu0
        %v421 = vadd.f32 %v365, %v420
        %v422 = vpop.f32.mrb[0].mxu0
        %423 = vmatprep.mubr.bf16.mxu0 0
        %424 = vmatmul.mubr.bf16.gmra.mrb[0].mxu0 %v334
        %v425 = vpop.f32.mrb[0].mxu0
        %v426 = vadd.f32 %v365, %v425
        %v427 = vpop.f32.mrb[0].mxu0
        %v428 = vpop.f32.mrb[0].mxu0
        %v429 = vadd.f32 %v365, %v428
        %v430 = vpop.f32.mrb[0].mxu0
        %431 = vmatprep.mubr.bf16.mxu0 0
        %432 = vmatmul.mubr.bf16.gmra.mrb[0].mxu0 %v335
        %v433 = vpop.f32.mrb[0].mxu0
        %v434 = vadd.f32 %v365, %v433
        %v435 = vpop.f32.mrb[0].mxu0
        %v436 = vpop.f32.mrb[0].mxu0
        %v437 = vadd.f32 %v365, %v436
        %v438 = vpop.f32.mrb[0].mxu0
        %439 = vmatprep.mubr.bf16.mxu0 0
        %440 = vmatmul.mubr.bf16.gmra.mrb[0].mxu0 %v336
        %v441 = vpop.f32.mrb[0].mxu0
        %v442 = vadd.f32 %v365, %v441
        %v443 = vpop.f32.mrb[0].mxu0
        %v444 = vpop.f32.mrb[0].mxu0
        %v445 = vadd.f32 %v365, %v444
        %v446 = vpop.f32.mrb[0].mxu0
        %447 = vmatprep.mubr.bf16.mxu0 0
        %448 = vmatmul.mubr.bf16.gmra.mrb[0].mxu0 %v337
        %v449 = vpop.f32.mrb[0].mxu0
        %v450 = vadd.f32 %v365, %v449
        %v451 = vpop.f32.mrb[0].mxu0
        %v452 = vpop.f32.mrb[0].mxu0
        %v453 = vadd.f32 %v365, %v452
        %v454 = vpop.f32.mrb[0].mxu0
        %455 = vmatprep.mubr.bf16.mxu0 0
        %456 = vmatmul.mubr.bf16.gmra.mrb[0].mxu0 %v338
        %v457 = vpop.f32.mrb[0].mxu0
        %v458 = vadd.f32 %v365, %v457
        %v459 = vpop.f32.mrb[0].mxu0
        %v460 = vpop.f32.mrb[0].mxu0
        %v461 = vadd.f32 %v365, %v460
        %v462 = vpop.f32.mrb[0].mxu0
        %463 = vmatprep.mubr.bf16.mxu0 0
        %464 = vmatmul.mubr.bf16.gmra.mrb[0].mxu0 %v339
        %v465 = vpop.f32.mrb[0].mxu0
        %v466 = vadd.f32 %v365, %v465
        %v467 = vpop.f32.mrb[0].mxu0
        %v468 = vpop.f32.mrb[0].mxu0
        %v469 = vadd.f32 %v365, %v468
        %v470 = vpop.f32.mrb[0].mxu0
        %471 = vmatprep.mubr.bf16.mxu0 0
        %472 = vmatmul.mubr.bf16.gmra.mrb[0].mxu0 %v340
        %v473 = vpop.f32.mrb[0].mxu0
        %v474 = vadd.f32 %v365, %v473
        %v475 = vpop.f32.mrb[0].mxu0
        %v476 = vpop.f32.mrb[0].mxu0
        %v477 = vadd.f32 %v365, %v476
        %v478 = vpop.f32.mrb[0].mxu0
        %479 = vmatprep.mubr.bf16.mxu0 0
        %480 = vmatmul.mubr.bf16.gmra.mrb[0].mxu0 %v341
        %v481 = vpop.f32.mrb[0].mxu0
        %v482 = vadd.f32 %v365, %v481
        %v483 = vpop.f32.mrb[0].mxu0
        %v484 = vpop.f32.mrb[0].mxu0
        %v485 = vadd.f32 %v365, %v484
        %v486 = vpop.f32.mrb[0].mxu0
        %487 = vmatprep.mubr.bf16.mxu0 0
        %488 = vmatmul.mubr.bf16.gmra.mrb[0].mxu0 %v342
        %v489 = vpop.f32.mrb[0].mxu0
        %v490 = vadd.f32 %v365, %v489
        %v491 = vpop.f32.mrb[0].mxu0
        %v492 = vpop.f32.mrb[0].mxu0
        %v493 = vadd.f32 %v365, %v492
        %v494 = vpop.f32.mrb[0].mxu0
        %495 = vmatprep.mubr.bf16.mxu0 0
        %496 = vmatmul.mubr.bf16.gmra.mrb[0].mxu0 %v343
        %v497 = vpop.f32.mrb[0].mxu0
        %v498 = vadd.f32 %v365, %v497
        %v499 = vpop.f32.mrb[0].mxu0
        %v500 = vpop.f32.mrb[0].mxu0
        %v501 = vadd.f32 %v365, %v500
        %v502 = vpop.f32.mrb[0].mxu0
        %503 = vmatprep.mubr.bf16.mxu0 0
        %504 = vmatmul.mubr.bf16.gmra.mrb[0].mxu0 %v344
        %v505 = vpop.f32.mrb[0].mxu0
        %v506 = vadd.f32 %v365, %v505
        %v507 = vpop.f32.mrb[0].mxu0
        %v508 = vpop.f32.mrb[0].mxu0
        %v509 = vadd.f32 %v365, %v508
        %v510 = vpop.f32.mrb[0].mxu0
        %511 = vmatprep.mubr.bf16.mxu0 0
        %512 = vmatmul.mubr.bf16.gmra.mrb[0].mxu0 %v345
        %v513 = vpop.f32.mrb[0].mxu0
        %v514 = vadd.f32 %v365, %v513
        %v515 = vpop.f32.mrb[0].mxu0
        %v516 = vpop.f32.mrb[0].mxu0
        %v517 = vadd.f32 %v365, %v516
        %v518 = vpop.f32.mrb[0].mxu0
        %519 = vmatprep.mubr.bf16.mxu0 0
        %520 = vmatmul.mubr.bf16.gmra.mrb[0].mxu0 %v346
        %v521 = vpop.f32.mrb[0].mxu0
        %v522 = vadd.f32 %v365, %v521
        %v523 = vpop.f32.mrb[0].mxu0
        %v524 = vpop.f32.mrb[0].mxu0
        %v525 = vadd.f32 %v365, %v524
        %v526 = vpop.f32.mrb[0].mxu0
        %527 = vdwg.mxu0
        %v529 = vlaneseq
        %v530 = vshrl.u32 %v529, 7
        %v531 = vsub.s32 0, %v530
        %v532 = vrot.slane %v360, %v531
        %v534 = vmul.f32 %v402, %v532
        %v535 = vmul.f32 %v405, %v532
        %v536 = vmul.f32 %v410, %v532
        %v537 = vmul.f32 %v413, %v532
        %v538 = vmul.f32 %v418, %v532
        %v539 = vmul.f32 %v421, %v532
        %v540 = vmul.f32 %v426, %v532
        %v541 = vmul.f32 %v429, %v532
        %v542 = vmul.f32 %v434, %v532
        %v543 = vmul.f32 %v437, %v532
        %v544 = vmul.f32 %v442, %v532
        %v545 = vmul.f32 %v445, %v532
        %v546 = vmul.f32 %v450, %v532
        %v547 = vmul.f32 %v453, %v532
        %v548 = vmul.f32 %v458, %v532
        %v549 = vmul.f32 %v461, %v532
        %v550 = vmul.f32 %v466, %v532
        %v551 = vmul.f32 %v469, %v532
        %v552 = vmul.f32 %v474, %v532
        %v553 = vmul.f32 %v477, %v532
        %v554 = vmul.f32 %v482, %v532
        %v555 = vmul.f32 %v485, %v532
        %v556 = vmul.f32 %v490, %v532
        %v557 = vmul.f32 %v493, %v532
        %v558 = vmul.f32 %v498, %v532
        %v559 = vmul.f32 %v501, %v532
        %v560 = vmul.f32 %v506, %v532
        %v561 = vmul.f32 %v509, %v532
        %v562 = vmul.f32 %v514, %v532
        %v563 = vmul.f32 %v517, %v532
        %v564 = vmul.f32 %v522, %v532
        %v565 = vmul.f32 %v525, %v532
        %v566 = vadd.f32 %v534, -5.0
        %v567 = vadd.f32 %v535, -5.0
        %v568 = vadd.f32 %v536, -5.0
        %v569 = vadd.f32 %v537, -5.0
        %v570 = vadd.f32 %v538, -5.0
        %v571 = vadd.f32 %v539, -5.0
        %v572 = vadd.f32 %v540, -5.0
        %v573 = vadd.f32 %v541, -5.0
        %v574 = vadd.f32 %v542, -5.0
        %v575 = vadd.f32 %v543, -5.0
        %v576 = vadd.f32 %v544, -5.0
        %v577 = vadd.f32 %v545, -5.0
        %v578 = vadd.f32 %v546, -5.0
        %v579 = vadd.f32 %v547, -5.0
        %v580 = vadd.f32 %v548, -5.0
        %v581 = vadd.f32 %v549, -5.0
        %v582 = vadd.f32 %v550, -5.0
        %v583 = vadd.f32 %v551, -5.0
        %v584 = vadd.f32 %v552, -5.0
        %v585 = vadd.f32 %v553, -5.0
        %v586 = vadd.f32 %v554, -5.0
        %v587 = vadd.f32 %v555, -5.0
        %v588 = vadd.f32 %v556, -5.0
        %v589 = vadd.f32 %v557, -5.0
        %v590 = vadd.f32 %v558, -5.0
        %v591 = vadd.f32 %v559, -5.0
        %v592 = vadd.f32 %v560, -5.0
        %v593 = vadd.f32 %v561, -5.0
        %v594 = vadd.f32 %v562, -5.0
        %v595 = vadd.f32 %v563, -5.0
        %v596 = vadd.f32 %v564, -5.0
        %v597 = vadd.f32 %v565, -5.0
        %v598 = vround.ne.pseudo %v566
        %v599 = vround.ne.pseudo %v567
        %v600 = vround.ne.pseudo %v568
        %v601 = vround.ne.pseudo %v569
        %v602 = vround.ne.pseudo %v570
        %v603 = vround.ne.pseudo %v571
        %v604 = vround.ne.pseudo %v572
        %v605 = vround.ne.pseudo %v573
        %v606 = vround.ne.pseudo %v574
        %v607 = vround.ne.pseudo %v575
        %v608 = vround.ne.pseudo %v576
        %v609 = vround.ne.pseudo %v577
        %v610 = vround.ne.pseudo %v578
        %v611 = vround.ne.pseudo %v579
        %v612 = vround.ne.pseudo %v580
        %v613 = vround.ne.pseudo %v581
        %v614 = vround.ne.pseudo %v582
        %v615 = vround.ne.pseudo %v583
        %v616 = vround.ne.pseudo %v584
        %v617 = vround.ne.pseudo %v585
        %v618 = vround.ne.pseudo %v586
        %v619 = vround.ne.pseudo %v587
        %v620 = vround.ne.pseudo %v588
        %v621 = vround.ne.pseudo %v589
        %v622 = vround.ne.pseudo %v590
        %v623 = vround.ne.pseudo %v591
        %v624 = vround.ne.pseudo %v592
        %v625 = vround.ne.pseudo %v593
        %v626 = vround.ne.pseudo %v594
        %v627 = vround.ne.pseudo %v595
        %v628 = vround.ne.pseudo %v596
        %v629 = vround.ne.pseudo %v597
        %v630 = vmax.f32 %v598, -128.0
        %v631 = vmax.f32 %v599, -128.0
        %v632 = vmax.f32 %v600, -128.0
        %v633 = vmax.f32 %v601, -128.0
        %v634 = vmax.f32 %v602, -128.0
        %v635 = vmax.f32 %v603, -128.0
        %v636 = vmax.f32 %v604, -128.0
        %v637 = vmax.f32 %v605, -128.0
        %v638 = vmax.f32 %v606, -128.0
        %v639 = vmax.f32 %v607, -128.0
        %v640 = vmax.f32 %v608, -128.0
        %v641 = vmax.f32 %v609, -128.0
        %v642 = vmax.f32 %v610, -128.0
        %v643 = vmax.f32 %v611, -128.0
        %v644 = vmax.f32 %v612, -128.0
        %v645 = vmax.f32 %v613, -128.0
        %v646 = vmax.f32 %v614, -128.0
        %v647 = vmax.f32 %v615, -128.0
        %v648 = vmax.f32 %v616, -128.0
        %v649 = vmax.f32 %v617, -128.0
        %v650 = vmax.f32 %v618, -128.0
        %v651 = vmax.f32 %v619, -128.0
        %v652 = vmax.f32 %v620, -128.0
        %v653 = vmax.f32 %v621, -128.0
        %v654 = vmax.f32 %v622, -128.0
        %v655 = vmax.f32 %v623, -128.0
        %v656 = vmax.f32 %v624, -128.0
        %v657 = vmax.f32 %v625, -128.0
        %v658 = vmax.f32 %v626, -128.0
        %v659 = vmax.f32 %v627, -128.0
        %v660 = vmax.f32 %v628, -128.0
        %v661 = vmax.f32 %v629, -128.0
        %v662 = vmin.f32 %v630, 127.0
        %v663 = vmin.f32 %v631, 127.0
        %v664 = vmin.f32 %v632, 127.0
        %v665 = vmin.f32 %v633, 127.0
        %v666 = vmin.f32 %v634, 127.0
        %v667 = vmin.f32 %v635, 127.0
        %v668 = vmin.f32 %v636, 127.0
        %v669 = vmin.f32 %v637, 127.0
        %v670 = vmin.f32 %v638, 127.0
        %v671 = vmin.f32 %v639, 127.0
        %v672 = vmin.f32 %v640, 127.0
        %v673 = vmin.f32 %v641, 127.0
        %v674 = vmin.f32 %v642, 127.0
        %v675 = vmin.f32 %v643, 127.0
        %v676 = vmin.f32 %v644, 127.0
        %v677 = vmin.f32 %v645, 127.0
        %v678 = vmin.f32 %v646, 127.0
        %v679 = vmin.f32 %v647, 127.0
        %v680 = vmin.f32 %v648, 127.0
        %v681 = vmin.f32 %v649, 127.0
        %v682 = vmin.f32 %v650, 127.0
        %v683 = vmin.f32 %v651, 127.0
        %v684 = vmin.f32 %v652, 127.0
        %v685 = vmin.f32 %v653, 127.0
        %v686 = vmin.f32 %v654, 127.0
        %v687 = vmin.f32 %v655, 127.0
        %v688 = vmin.f32 %v656, 127.0
        %v689 = vmin.f32 %v657, 127.0
        %v690 = vmin.f32 %v658, 127.0
        %v691 = vmin.f32 %v659, 127.0
        %v692 = vmin.f32 %v660, 127.0
        %v693 = vmin.f32 %v661, 127.0
        %v694 = vtrunc.f32 %v662
        %v695 = vtrunc.f32 %v663
        %v696 = vtrunc.f32 %v664
        %v697 = vtrunc.f32 %v665
        %v698 = vtrunc.f32 %v666
        %v699 = vtrunc.f32 %v667
        %v700 = vtrunc.f32 %v668
        %v701 = vtrunc.f32 %v669
        %v702 = vtrunc.f32 %v670
        %v703 = vtrunc.f32 %v671
        %v704 = vtrunc.f32 %v672
        %v705 = vtrunc.f32 %v673
        %v706 = vtrunc.f32 %v674
        %v707 = vtrunc.f32 %v675
        %v708 = vtrunc.f32 %v676
        %v709 = vtrunc.f32 %v677
        %v710 = vtrunc.f32 %v678
        %v711 = vtrunc.f32 %v679
        %v712 = vtrunc.f32 %v680
        %v713 = vtrunc.f32 %v681
        %v714 = vtrunc.f32 %v682
        %v715 = vtrunc.f32 %v683
        %v716 = vtrunc.f32 %v684
        %v717 = vtrunc.f32 %v685
        %v718 = vtrunc.f32 %v686
        %v719 = vtrunc.f32 %v687
        %v720 = vtrunc.f32 %v688
        %v721 = vtrunc.f32 %v689
        %v722 = vtrunc.f32 %v690
        %v723 = vtrunc.f32 %v691
        %v724 = vtrunc.f32 %v692
        %v725 = vtrunc.f32 %v693
        %v726 = vpack.c.f32.eXmY %v694, %v695, 312
        %v730 = vpack.c.f32.eXmY %v696, %v697, 312
        %v734 = vpack.c.b8 %v730, %v726
        %v736 = vpack.c.f32.eXmY %v698, %v699, 312
        %v740 = vpack.c.f32.eXmY %v700, %v701, 312
        %v744 = vpack.c.b8 %v740, %v736
        %v746 = vpack.c.f32.eXmY %v702, %v703, 312
        %v750 = vpack.c.f32.eXmY %v704, %v705, 312
        %v754 = vpack.c.b8 %v750, %v746
        %v756 = vpack.c.f32.eXmY %v706, %v707, 312
        %v760 = vpack.c.f32.eXmY %v708, %v709, 312
        %v764 = vpack.c.b8 %v760, %v756
        %v766 = vpack.c.f32.eXmY %v710, %v711, 312
        %v770 = vpack.c.f32.eXmY %v712, %v713, 312
        %v774 = vpack.c.b8 %v770, %v766
        %v776 = vpack.c.f32.eXmY %v714, %v715, 312
        %v780 = vpack.c.f32.eXmY %v716, %v717, 312
        %v784 = vpack.c.b8 %v780, %v776
        %v786 = vpack.c.f32.eXmY %v718, %v719, 312
        %v790 = vpack.c.f32.eXmY %v720, %v721, 312
        %v794 = vpack.c.b8 %v790, %v786
        %v796 = vpack.c.f32.eXmY %v722, %v723, 312
        %v800 = vpack.c.f32.eXmY %v724, %v725, 312
        %v804 = vpack.c.b8 %v800, %v796
        %806 = vst [vmem:[%s306] sm:$0xff] %v734
        %807 = vst [vmem:[%s306 + $0x8] sm:$0xff] %v744
        %808 = vst [vmem:[%s306 + $0x10] sm:$0xff] %v754
        %809 = vst [vmem:[%s306 + $0x18] sm:$0xff] %v764
        %810 = vst [vmem:[%s306 + $0x20] sm:$0xff] %v774
        %811 = vst [vmem:[%s306 + $0x28] sm:$0xff] %v784
        %812 = vst [vmem:[%s306 + $0x30] sm:$0xff] %v794
        %813 = vst [vmem:[%s306 + $0x38] sm:$0xff] %v804
        %s814 = sand.u32 %s165, 1
        %s815 = scalar_lea.sflag [#allocation4], %s814
        %s816 = sand.u32 %s165, 1
        %s817 = smul.addr %s816, 64
        %s818 = scalar_lea.vmem [#allocation7], %s817
        // Predicated region
        $region45: #{tpu_custom_call.1} parent=35 // pred_check
          %p819 = pneg %p175
        $region46: #{tpu_custom_call.1} parent=35 // pred_check_branch
          %821 = sbr.rel (%p819) target = $region48
        $region47: #{tpu_custom_call.1} parent=35 // pred_region
          %s822 = sadd.s32 %s27, %s29
          %s823 = smul.u32 8, %s28
          %s825 = ssub.s32 1024, 1024
          %826 = vsyncadd %s815, %s825
          %s827 = sadd.s32 %s822, %s823
          %s828 = smul.addr %s827, 128
          %s829 = scalar_lea.hbm %s4, %s828
          %s830 = sshll.u32 %s818, 4
          %s831 = int_to_ptr.vmem [resolvable:$true] %s830
          %836 = dma.vmem_to_hbm [thread:$0]  %s831, 1024, %s829, %s815, 128, 128, 8
        $region48: #{tpu_custom_call.1} parent=35 // pred_fallthru
          _
      $region36: #{tpu_custom_call.1} parent=5 // pred_fallthru
        _
      %p837 = scmp.le.s32.totalorder 2, %s17
      // Predicated region
      $region49: #{tpu_custom_call.1} parent=5 // pred_check
        %p838 = pneg %p837
      $region50: #{tpu_custom_call.1} parent=5 // pred_check_branch
        %840 = sbr.rel (%p838) target = $region52
      $region51: #{tpu_custom_call.1} parent=5 // pred_region
        %s841 = ssub.s32 %s17, 2
        // Predicated region
        $region53: #{tpu_custom_call.1} parent=51 // pred_check
          %p842 = pneg %p181
        $region54: #{tpu_custom_call.1} parent=51 // pred_check_branch
          %844 = sbr.rel (%p842) target = $region56
        $region55: #{tpu_custom_call.1} parent=51 // pred_region
          %s845 = sand.u32 %s166, 1
          %s846 = scalar_lea.sflag [#allocation4], %s845
          %s847 = sand.u32 %s166, 1
          %s848 = smul.addr %s847, 64
          %s849 = scalar_lea.vmem [#allocation7], %s848
          %850 = dma.done %s846, 1024
        $region56: #{tpu_custom_call.1} parent=51 // pred_fallthru
          _
      $region52: #{tpu_custom_call.1} parent=5 // pred_fallthru
        _
    $region6: #{tpu_custom_call.1} parent=1 // loop_footer
      %s21 = sadd.s32 1, %s17
    $region7: #{tpu_custom_call.1} parent=1 // loop_footer_branch
      %16 = sbr.rel target = $region3
    $region8: #{tpu_custom_call.1} parent=1 // loop_exit
      _
    %851 = vsyncpa [#allocation3], 1
    %s852 = scalar_lea.sflag [#allocation3], 1
    %853 = vsyncpa %s852, 1
    %854 = vsyncpa [#allocation6], 1
    %855 = vsyncpa [#allocation4], 1
    %s856 = scalar_lea.sflag [#allocation4], 1
    %857 = vsyncpa %s856, 1

</llo_original>
